<compile_context>
chip_gen: v6e
topology: v6e:2x2x1
jax: 0.10.0
libtpu: 0.0.40
codegen_flags: <defaults>
</compile_context>

<pallas_src>
import functools

import jax
import jax.numpy as jnp
from jax.experimental import pallas as pl
from jax.experimental.pallas import tpu as pltpu


# ------------------------- fused MLP + sigmoid epilogue ---------------------- #

def _mlp_attention(s, m, w1, w2, hw):
    """Shared 1x1-conv MLP + sigmoid on column stats. s, m: (C, 1) sum/max."""
    avg = s * (1.0 / hw)
    # Stack avg|max as the two lane-columns of a single operand (select, no
    # concatenate) so the shared MLP issues two matmuls instead of four.
    col = jax.lax.broadcasted_iota(jnp.int32, (avg.shape[0], 2), 1)
    stats = jnp.where(col == 0, avg, m)                                # (C, 2)
    h = jnp.maximum(
        jnp.dot(w1, stats, preferred_element_type=jnp.float32), 0.0)   # (C//r, 2)
    o = jnp.dot(w2, h, preferred_element_type=jnp.float32)             # (C, 2)
    # Sum of the two columns == MLP(avg) + MLP(max).
    return jax.nn.sigmoid(jnp.sum(o, axis=-1, keepdims=True))          # (C, 1)


# --------------------------------- kernel ----------------------------------- #

def _ca_kernel(x_ref, w1_ref, w2_ref, out_ref, *scratch, hw, hw_tile, n_hw):
    # x_ref:   (1, C, hw_tile)  spatial positions on lanes, channels on sublanes
    # w1_ref:  (C//r, C), w2_ref: (C, C//r)  (resident; constant index map)
    # out_ref: (1, C, 1)        per-batch channel attention (column)
    # scratch: () if n_hw == 1 else ((C,128) f32 sum acc, (C,128) f32 max acc)

    if n_hw == 1:
        # Whole image in one block: direct reduce (single XLU pass) + MLP.
        x = x_ref[0].astype(jnp.float32)                       # (C, HW)
        s = jnp.sum(x, axis=-1, keepdims=True)
        m = jnp.max(x, axis=-1, keepdims=True)
        out_ref[0] = _mlp_attention(
            s, m, w1_ref[...], w2_ref[...], hw).astype(out_ref.dtype)
        return

    sum_acc, max_acc = scratch
    k = pl.program_id(1)

    @pl.when(k == 0)
    def _init():
        sum_acc[...] = jnp.zeros_like(sum_acc)
        max_acc[...] = jnp.full_like(max_acc, -jnp.inf)

    n_groups = hw_tile // 128          # hw_tile is a multiple of 128 here

    def accumulate(g, valid_lanes=None):
        xg = x_ref[0, :, pl.ds(g * 128, 128)].astype(jnp.float32)   # (C, 128)
        if valid_lanes is None:
            sum_acc[...] += xg
            max_acc[...] = jnp.maximum(max_acc[...], xg)
        else:
            lane = jax.lax.broadcasted_iota(jnp.int32, (1, 128), 1)
            ok = lane < valid_lanes
            sum_acc[...] += jnp.where(ok, xg, 0.0)
            max_acc[...] = jnp.maximum(max_acc[...],
                                       jnp.where(ok, xg, -jnp.inf))

    if hw % hw_tile == 0:
        for g in range(n_groups):
            accumulate(g)
    else:
        @pl.when(k != n_hw - 1)
        def _full_tile():
            for g in range(n_groups):
                accumulate(g)

        @pl.when(k == n_hw - 1)
        def _partial_tile():
            tile_start = (n_hw - 1) * hw_tile            # static
            for g in range(n_groups):
                start = tile_start + g * 128
                if start + 128 <= hw:
                    accumulate(g)                        # fully valid group
                elif start < hw:
                    accumulate(g, valid_lanes=hw - start)  # straddling group
                # else: group entirely past the image -> skip

    @pl.when(k == n_hw - 1)
    def _finalize():
        s = jnp.sum(sum_acc[...], axis=-1, keepdims=True)   # one XLU reduce
        m = jnp.max(max_acc[...], axis=-1, keepdims=True)
        out_ref[0] = _mlp_attention(
            s, m, w1_ref[...], w2_ref[...], hw).astype(out_ref.dtype)


# --------------------------------- wrapper ----------------------------------- #

def _pick_hw_tile(hw, c, elem_bytes, vmem_budget_bytes=20 * 1024 * 1024):
    """Largest lane (HW) tile whose double-buffered input block fits the budget."""
    max_lanes = max(128, vmem_budget_bytes // (2 * elem_bytes * max(c, 1)))
    if hw <= max_lanes:
        return hw                              # whole image in one block
    tile = min(max_lanes, 8192)                # big tiles -> near HBM roofline
    return max(128, (tile // 128) * 128)       # lane (128) alignment


def channel_attention(x, w1, w2, *, hw_tile=None):
    """x: (B, C, H, W); w1: (C//r, C); w2: (C, C//r). Returns (B, C, 1, 1)."""
    B, C, H, W = x.shape
    HW = H * W
    hidden = w1.shape[0]

    # Free reshape (no transpose, no extra HBM pass): HW on lanes, C on sublanes.
    x_flat = x.reshape(B, C, HW)

    if hw_tile is None:
        hw_tile = _pick_hw_tile(HW, C, x_flat.dtype.itemsize)
    else:
        hw_tile = min(hw_tile, HW)
        if hw_tile < HW and hw_tile % 128 != 0:
            raise ValueError("hw_tile must be a multiple of 128 when tiling HW")
    n_hw = pl.cdiv(HW, hw_tile)

    scratch_shapes = []
    if n_hw > 1:
        scratch_shapes = [pltpu.VMEM((C, 128), jnp.float32),
                          pltpu.VMEM((C, 128), jnp.float32)]

    # TODO(synk): on v7x with B == 1 a 2-way parallel split of the HW reduction
    # (or CORE_PARALLEL) would keep both TensorCores busy; single-TC here.
    out = pl.pallas_call(
        functools.partial(_ca_kernel, hw=HW, hw_tile=hw_tile, n_hw=n_hw),
        out_shape=jax.ShapeDtypeStruct((B, C, 1), jnp.float32),
        grid_spec=pltpu.PrefetchScalarGridSpec(
            num_scalar_prefetch=0,
            grid=(B, n_hw),
            in_specs=[
                pl.BlockSpec((1, C, hw_tile), lambda b, k: (b, 0, k)),
                pl.BlockSpec((hidden, C), lambda b, k: (0, 0)),   # resident
                pl.BlockSpec((C, hidden), lambda b, k: (0, 0)),   # resident
            ],
            out_specs=pl.BlockSpec((1, C, 1), lambda b, k: (b, 0, 0)),
            scratch_shapes=scratch_shapes,
        ),
        compiler_params=pltpu.CompilerParams(
            dimension_semantics=("parallel", "arbitrary"),
            vmem_limit_bytes=32 * 1024 * 1024),
    )(x_flat, w1, w2)

    return out.reshape(B, C, 1, 1)


# -------------------------------- reference ---------------------------------- #

def channel_attention_ref(x, w1, w2):
    """Pure-JAX reference mirroring the PyTorch forward."""
    B, C, H, W = x.shape
    avg = jnp.mean(x, axis=(2, 3))                       # (B, C)
    mx = jnp.max(x, axis=(2, 3))                         # (B, C)

    def mlp(v):                                          # v: (B, C)
        h = jnp.maximum(v @ w1.T, 0.0)                   # (B, C//r)
        return h @ w2.T                                  # (B, C)

    return jax.nn.sigmoid(mlp(avg) + mlp(mx)).reshape(B, C, 1, 1)


if __name__ == "__main__":
    def run_case(B, C, H, W, ratio, key, force_hw_tile=None):
        hidden = C // ratio
        kx, k1, k2 = jax.random.split(key, 3)
        x = jax.random.normal(kx, (B, C, H, W), dtype=jnp.float32)
        # 1x1 Conv2d weights (no bias): (out_ch, in_ch, 1, 1) -> matrices.
        w1 = jax.random.normal(k1, (hidden, C), dtype=jnp.float32) * (1.0 / C) ** 0.5
        w2 = jax.random.normal(k2, (C, hidden), dtype=jnp.float32) * (1.0 / hidden) ** 0.5

        out = jax.block_until_ready(
            channel_attention(x, w1, w2, hw_tile=force_hw_tile))
        ref = channel_attention_ref(x, w1, w2)
        assert out.shape == (B, C, 1, 1), out.shape
        err = float(jnp.max(jnp.abs(out - ref)))
        assert jnp.allclose(out, ref, atol=1e-5, rtol=1e-5), err

    key = jax.random.PRNGKey(0)
    ka, kb, kc = jax.random.split(key, 3)
    # Primary small case (single-block path, fused MLP epilogue).
    run_case(2, 64, 16, 16, 16, ka)
    # Stress: HW tiling with a masked straddling lane-group (400 = 3*128 + 16).
    run_case(1, 256, 20, 20, 16, kb, force_hw_tile=128)
    # Stress: HW tiling, evenly divisible, 2 lane-groups per step.
    run_case(1, 64, 32, 32, 8, kc, force_hw_tile=256)
    print("KERNEL_OK")
</pallas_src>

<mosaic_0001>
module attributes {stable_mosaic.version = 11 : i64} {
  func.func @_ca_kernel(%arg0: i32, %arg1: i32, %arg2: memref<1x64x256xf32, #tpu.memory_space<vmem>>, %arg3: memref<4x64xf32, #tpu.memory_space<vmem>>, %arg4: memref<64x4xf32, #tpu.memory_space<vmem>>, %arg5: memref<1x64x1xf32, #tpu.memory_space<vmem>>) attributes {dimension_semantics = [#tpu.dimension_semantics<parallel>, #tpu.dimension_semantics<arbitrary>], iteration_bounds = array<i64: 2, 1>, scalar_prefetch = 0 : i64, scratch_operands = 0 : i64, tpu.core_type = #tpu.core_type<tc>, window_params = [{transform_indices = @transform_0, window_bounds = array<i64: 1, 64, 256>}, {pipeline_mode = #tpu.pipeline_mode<synchronous>, transform_indices = @transform_1, window_bounds = array<i64: 4, 64>}, {pipeline_mode = #tpu.pipeline_mode<synchronous>, transform_indices = @transform_2, window_bounds = array<i64: 64, 4>}, {transform_indices = @transform_3, window_bounds = array<i64: 1, 64, 1>}]} {
    %c0 = arith.constant 0 : index
    %c0_0 = arith.constant 0 : index
    %c0_1 = arith.constant 0 : index
    %0 = vector.load %arg2[%c0, %c0_0, %c0_1] : memref<1x64x256xf32, #tpu.memory_space<vmem>>, vector<1x64x256xf32>
    %1 = vector.shape_cast %0 : vector<1x64x256xf32> to vector<64x256xf32>
    %cst = arith.constant dense<0.000000e+00> : vector<64xf32>
    %2 = vector.multi_reduction <add>, %1, %cst [1] : vector<64x256xf32> to vector<64xf32>
    %3 = vector.shape_cast %2 : vector<64xf32> to vector<64x1xf32>
    %cst_2 = arith.constant dense<0xFF800000> : vector<64xf32>
    %4 = vector.multi_reduction <maximumf>, %1, %cst_2 [1] : vector<64x256xf32> to vector<64xf32>
    %5 = vector.shape_cast %4 : vector<64xf32> to vector<64x1xf32>
    %c0_3 = arith.constant 0 : index
    %c0_4 = arith.constant 0 : index
    %6 = vector.load %arg3[%c0_3, %c0_4] : memref<4x64xf32, #tpu.memory_space<vmem>>, vector<4x64xf32>
    %c0_5 = arith.constant 0 : index
    %c0_6 = arith.constant 0 : index
    %7 = vector.load %arg4[%c0_5, %c0_6] : memref<64x4xf32, #tpu.memory_space<vmem>>, vector<64x4xf32>
    %cst_7 = arith.constant 3.906250e-03 : f32
    %8 = vector.broadcast %cst_7 : f32 to vector<64x1xf32>
    %9 = arith.mulf %3, %8 : vector<64x1xf32>
    %10 = tpu.iota {dimensions = array<i32: 1>} : vector<64x2xi32>
    %c0_i32 = arith.constant 0 : i32
    %11 = vector.broadcast %c0_i32 : i32 to vector<64x2xi32>
    %12 = arith.cmpi eq, %10, %11 : vector<64x2xi32>
    %13 = vector.shape_cast %9 : vector<64x1xf32> to vector<64x1xf32>
    %14 = vector.broadcast %13 : vector<64x1xf32> to vector<64x2xf32>
    %15 = vector.shape_cast %5 : vector<64x1xf32> to vector<64x1xf32>
    %16 = vector.broadcast %15 : vector<64x1xf32> to vector<64x2xf32>
    %17 = arith.select %12, %14, %16 : vector<64x2xi1>, vector<64x2xf32>
    %cst_8 = arith.constant dense<0.000000e+00> : vector<4x2xf32>
    %18 = tpu.matmul %6, %17, %cst_8 {dimension_numbers = #tpu.dot_dimension_numbers<[1], [0], [0], [1], [0, 0, 1, 1], [], []>} : vector<4x64xf32>, vector<64x2xf32>, vector<4x2xf32> -> vector<4x2xf32>
    %cst_9 = arith.constant 0.000000e+00 : f32
    %19 = vector.broadcast %cst_9 : f32 to vector<4x2xf32>
    %20 = arith.maximumf %18, %19 : vector<4x2xf32>
    %cst_10 = arith.constant dense<0.000000e+00> : vector<64x2xf32>
    %21 = tpu.matmul %7, %20, %cst_10 {dimension_numbers = #tpu.dot_dimension_numbers<[1], [0], [0], [1], [0, 0, 1, 1], [], []>} : vector<64x4xf32>, vector<4x2xf32>, vector<64x2xf32> -> vector<64x2xf32>
    %cst_11 = arith.constant dense<0.000000e+00> : vector<64xf32>
    %22 = vector.multi_reduction <add>, %21, %cst_11 [1] : vector<64x2xf32> to vector<64xf32>
    %23 = vector.shape_cast %22 : vector<64xf32> to vector<64x1xf32>
    %24 = arith.negf %23 : vector<64x1xf32>
    %25 = math.exp %24 : vector<64x1xf32>
    %cst_12 = arith.constant 1.000000e+00 : f32
    %26 = vector.broadcast %cst_12 : f32 to vector<64x1xf32>
    %27 = arith.addf %26, %25 : vector<64x1xf32>
    %28 = arith.divf %26, %27 : vector<64x1xf32>
    %c0_13 = arith.constant 0 : index
    %c0_14 = arith.constant 0 : index
    %c0_15 = arith.constant 0 : index
    %29 = vector.load %arg5[%c0_13, %c0_14, %c0_15] : memref<1x64x1xf32, #tpu.memory_space<vmem>>, vector<1x64x1xf32>
    %30 = vector.shape_cast %29 : vector<1x64x1xf32> to vector<64x1xf32>
    %31 = vector.shape_cast %28 : vector<64x1xf32> to vector<1x64x1xf32>
    tpu.vector_store %arg5[%c0_13, %c0_14, %c0_15], %31 {strides = array<i32>} : memref<1x64x1xf32, #tpu.memory_space<vmem>>, vector<1x64x1xf32>,
    return
  }
  func.func @transform_0(%arg0: i32, %arg1: i32) -> (i32, i32, i32) {
    %c0_i32 = arith.constant 0 : i32
    %c0_i32_0 = arith.constant 0 : i32
    return %arg0, %c0_i32, %arg1 : i32, i32, i32
  }
  func.func @transform_1(%arg0: i32, %arg1: i32) -> (i32, i32) {
    %c0_i32 = arith.constant 0 : i32
    %c0_i32_0 = arith.constant 0 : i32
    %c0_i32_1 = arith.constant 0 : i32
    return %c0_i32, %c0_i32_0 : i32, i32
  }
  func.func @transform_2(%arg0: i32, %arg1: i32) -> (i32, i32) {
    %c0_i32 = arith.constant 0 : i32
    %c0_i32_0 = arith.constant 0 : i32
    %c0_i32_1 = arith.constant 0 : i32
    return %c0_i32, %c0_i32_0 : i32, i32
  }
  func.func @transform_3(%arg0: i32, %arg1: i32) -> (i32, i32, i32) {
    %c0_i32 = arith.constant 0 : i32
    %c0_i32_0 = arith.constant 0 : i32
    %c0_i32_1 = arith.constant 0 : i32
    return %arg0, %c0_i32, %c0_i32_0 : i32, i32, i32
  }
}

</mosaic_0001>

<llo_original>
// kernel: tpu_custom_call.1
$region0: #{tpu_custom_call.1}
  #allocation0 [shape = 'u32[]', space=smem, size = 0x4, offset = 0x4, fixed_abs, tag = 'smem constant byte address 0x4 - core index']
  #allocation1 [shape = 'u32[144,128]{1,0:T(1,128)}', space=vmem, size = 0x12000, scoped, tag = 'internal scratch']
  %s0 = inlined_call_operand.hbm [shape: f32[2,64,256], index: 0, kind: input, shape index: {}]
  %s1 = inlined_call_operand.vmem [shape: f32[4,64], index: 1, kind: input, shape index: {}]
  %s2 = inlined_call_operand.vmem [shape: f32[64,4], index: 2, kind: input, shape index: {}]
  %s3 = inlined_call_operand.vmem [shape: f32[2,64,1], index: 3, kind: output, shape index: {}]
  %s4 = sld [smem:[#allocation0]]
  $region49: #{tpu_custom_call.1} parent=0
    _
  %s6 = ssub.s32 1, %s4
  %s7 = scalar_select 0, %s6, %s4
  $region1: #{tpu_custom_call.1} parent=0
    #allocation2 [shape = 'u8[131072]{0}', space=vmem, size = 0x20000, scoped, tag = 'input window, operand 0']
    #allocation3 [shape = 's32[2]{0}', space=sflag, size = 0x8, scoped, tag = 'scoped memory for tpu_custom_call.1']
    %8 = vsyncpa [#allocation3], 0
    %s9 = scalar_lea.sflag [#allocation3], 1
    %10 = vsyncpa %s9, 0
    loop: start=0, step=1, limit=4
    $region2: #{tpu_custom_call.1} parent=1 // loop_pre_header
      _
    $region3: #{tpu_custom_call.1} parent=1 // loop_header
      %s12 = sphi 0, %s16
      %p13 = scmp.ge.s32.totalorder %s12, 4
      %s19 = sphi 0, %s31
      %s20 = sphi 0, %s27
      %s21 = sphi 0, %s19
      %s22 = sphi 0, %s20
      %s23 = sphi 0, %s21
      %s24 = sphi 0, %s22
      %s36 = sphi 0, %s38
      %s39 = sphi 0, %s36
      %s40 = sphi 0, %s39
      %s56 = sphi 0, %s40
      %s60 = sphi 0, %s60
      %s62 = sphi 0, %s60
      %s63 = sphi 0, %s62
      %s77 = sphi 0, %s63
      %s81 = sphi 0, %s81
      %s83 = sphi 0, %s81
      %s84 = sphi 0, %s83
      %s98 = sphi 0, %s84
      %s104 = sphi 0, %s106
      %s107 = sphi 0, %s104
      %s108 = sphi 0, %s107
      %s124 = sphi 0, %s108
    $region4: #{tpu_custom_call.1} parent=1 // loop_header_branch
      %15 = sbr.rel (%p13) target = $region8
    $region5: #{tpu_custom_call.1} parent=1 // loop_body
      %s17 = ssub.s32 %s12, 1
      %s18 = ssub.s32 %s12, 2
      %s25 = sadd.s32 1, %s20
      %p26 = scmp.ge.s32.totalorder %s25, 1
      %s27 = scalar_select %p26, 0, %s25
      %s28 = sadd.s32 1, %s19
      %s29 = scalar_select %p26, %s28, %s19
      %p30 = scmp.ge.s32.totalorder %s29, 2
      %s31 = scalar_select %p30, 0, %s29
      %s32 = ssub.s32 %s19, %s31
      %s33 = ssub.s32 %s20, %s27
      %s34 = sor.u32 %s32, %s33
      %p35 = scmp.eq.s32.totalorder %s34, 0
      %s37 = sadd.s32 %s36, 1
      %s38 = scalar_select %p35, %s36, %s37
      %p41 = pneg %p35
      %p42 = scmp.eq.s32.totalorder %s12, 1
      %p43 = por %p41, %p42
      %p44 = scmp.ne.s32.totalorder %s36, %s39
      %p45 = scmp.eq.s32.totalorder %s12, 0
      %p46 = por %p44, %p45
      %p47 = scmp.ne.s32.totalorder %s36, %s39
      %p48 = scmp.eq.s32.totalorder %s17, 1
      %p49 = por %p47, %p48
      %p50 = scmp.ne.s32.totalorder %s39, %s40
      %p51 = scmp.eq.s32.totalorder %s17, 0
      %p52 = por %p50, %p51
      %p53 = scmp.ne.s32.totalorder %s39, %s40
      %p54 = scmp.eq.s32.totalorder %s18, 1
      %p55 = por %p53, %p54
      %p57 = scmp.ne.s32.totalorder %s40, %s56
      %p58 = scmp.eq.s32.totalorder %s18, 0
      %p59 = por %p57, %p58
      %s61 = sadd.s32 %s60, 1
      %p64 = scmp.eq.s32.totalorder %s12, 1
      %p65 = scmp.ne.s32.totalorder %s60, %s62
      %p66 = scmp.eq.s32.totalorder %s12, 0
      %p67 = por %p65, %p66
      %p68 = scmp.ne.s32.totalorder %s60, %s62
      %p69 = scmp.eq.s32.totalorder %s17, 1
      %p70 = por %p68, %p69
      %p71 = scmp.ne.s32.totalorder %s62, %s63
      %p72 = scmp.eq.s32.totalorder %s17, 0
      %p73 = por %p71, %p72
      %p74 = scmp.ne.s32.totalorder %s62, %s63
      %p75 = scmp.eq.s32.totalorder %s18, 1
      %p76 = por %p74, %p75
      %p78 = scmp.ne.s32.totalorder %s63, %s77
      %p79 = scmp.eq.s32.totalorder %s18, 0
      %p80 = por %p78, %p79
      %s82 = sadd.s32 %s81, 1
      %p85 = scmp.eq.s32.totalorder %s12, 1
      %p86 = scmp.ne.s32.totalorder %s81, %s83
      %p87 = scmp.eq.s32.totalorder %s12, 0
      %p88 = por %p86, %p87
      %p89 = scmp.ne.s32.totalorder %s81, %s83
      %p90 = scmp.eq.s32.totalorder %s17, 1
      %p91 = por %p89, %p90
      %p92 = scmp.ne.s32.totalorder %s83, %s84
      %p93 = scmp.eq.s32.totalorder %s17, 0
      %p94 = por %p92, %p93
      %p95 = scmp.ne.s32.totalorder %s83, %s84
      %p96 = scmp.eq.s32.totalorder %s18, 1
      %p97 = por %p95, %p96
      %p99 = scmp.ne.s32.totalorder %s84, %s98
      %p100 = scmp.eq.s32.totalorder %s18, 0
      %p101 = por %p99, %p100
      %s102 = ssub.s32 %s19, %s31
      %p103 = scmp.eq.s32.totalorder %s102, 0
      %s105 = sadd.s32 %s104, 1
      %s106 = scalar_select %p103, %s104, %s105
      %p109 = pneg %p103
      %p110 = scmp.eq.s32.totalorder %s12, 1
      %p111 = por %p109, %p110
      %p112 = scmp.ne.s32.totalorder %s104, %s107
      %p113 = scmp.eq.s32.totalorder %s12, 0
      %p114 = por %p112, %p113
      %p115 = scmp.ne.s32.totalorder %s104, %s107
      %p116 = scmp.eq.s32.totalorder %s17, 1
      %p117 = por %p115, %p116
      %p118 = scmp.ne.s32.totalorder %s107, %s108
      %p119 = scmp.eq.s32.totalorder %s17, 0
      %p120 = por %p118, %p119
      %p121 = scmp.ne.s32.totalorder %s107, %s108
      %p122 = scmp.eq.s32.totalorder %s18, 1
      %p123 = por %p121, %p122
      %p125 = scmp.ne.s32.totalorder %s108, %s124
      %p126 = scmp.eq.s32.totalorder %s18, 0
      %p127 = por %p125, %p126
      %p128 = scmp.le.s32.totalorder 1, %s12
      %p129 = scmp.lt.s32.totalorder %s12, 3
      %p130 = pnand %p128, %p129
      %p131 = pneg %p130
      // Predicated region
      $region9: #{tpu_custom_call.1} parent=5 // pred_check
        _
      $region10: #{tpu_custom_call.1} parent=5 // pred_check_branch
        %133 = sbr.rel (%p130) target = $region12
      $region11: #{tpu_custom_call.1} parent=5 // pred_region
        %s134 = ssub.s32 %s12, 1
        // Predicated region
        $region13: #{tpu_custom_call.1} parent=11 // pred_check
          %p135 = pneg %p73
        $region14: #{tpu_custom_call.1} parent=11 // pred_check_branch
          %137 = sbr.rel (%p135) target = $region16
        $region15: #{tpu_custom_call.1} parent=11 // pred_region
          _
        $region16: #{tpu_custom_call.1} parent=11 // pred_fallthru
          _
        // Predicated region
        $region17: #{tpu_custom_call.1} parent=11 // pred_check
          %p138 = pneg %p94
        $region18: #{tpu_custom_call.1} parent=11 // pred_check_branch
          %140 = sbr.rel (%p138) target = $region20
        $region19: #{tpu_custom_call.1} parent=11 // pred_region
          _
        $region20: #{tpu_custom_call.1} parent=11 // pred_fallthru
          _
      $region12: #{tpu_custom_call.1} parent=5 // pred_fallthru
        _
      %p141 = scmp.lt.s32.totalorder %s12, 2
      // Predicated region
      $region21: #{tpu_custom_call.1} parent=5 // pred_check
        %p142 = pneg %p141
      $region22: #{tpu_custom_call.1} parent=5 // pred_check_branch
        %144 = sbr.rel (%p142) target = $region24
      $region23: #{tpu_custom_call.1} parent=5 // pred_region
        // Predicated region
        $region25: #{tpu_custom_call.1} parent=23 // pred_check
          %p145 = pneg %p46
        $region26: #{tpu_custom_call.1} parent=23 // pred_check_branch
          %147 = sbr.rel (%p145) target = $region28
        $region27: #{tpu_custom_call.1} parent=23 // pred_region
          %s148 = sand.u32 %s36, 1
          %s149 = scalar_lea.sflag [#allocation3], %s148
          %s150 = sand.u32 %s36, 1
          %s151 = smul.addr %s150, 128
          %s152 = scalar_lea.vmem [#allocation2], %s151
          %s153 = smul.u32 2, %s20
          %s155 = ssub.s32 2048, 2048
          %156 = vsyncadd %s149, %s155
          %s157 = smul.addr %s19, 16
          %s158 = sadd.s32 %s153, %s157
          %s159 = smul.addr %s158, 128
          %s160 = scalar_lea.hbm %s0, %s159
          %s161 = sshll.u32 %s152, 4
          %s162 = int_to_ptr.vmem [resolvable:$true] %s161
          %167 = dma.hbm_to_vmem [thread:$0]  %s160, 2048, %s162, %s149, 256, 256, 16
        $region28: #{tpu_custom_call.1} parent=23 // pred_fallthru
          _
      $region24: #{tpu_custom_call.1} parent=5 // pred_fallthru
        _
      %p168 = scmp.le.s32.totalorder 1, %s12
      %p169 = scmp.lt.s32.totalorder %s12, 3
      %p170 = pnand %p168, %p169
      %p171 = pneg %p170
      // Predicated region
      $region29: #{tpu_custom_call.1} parent=5 // pred_check
        _
      $region30: #{tpu_custom_call.1} parent=5 // pred_check_branch
        %173 = sbr.rel (%p170) target = $region32
      $region31: #{tpu_custom_call.1} parent=5 // pred_region
        %s174 = ssub.s32 %s12, 1
        %s175 = sand.u32 %s39, 1
        %s176 = scalar_lea.sflag [#allocation3], %s175
        %s177 = sand.u32 %s39, 1
        %s178 = smul.addr %s177, 128
        %s179 = scalar_lea.vmem [#allocation2], %s178
        // Predicated region
        $region33: #{tpu_custom_call.1} parent=31 // pred_check
          %p180 = pneg %p52
        $region34: #{tpu_custom_call.1} parent=31 // pred_check_branch
          %182 = sbr.rel (%p180) target = $region36
        $region35: #{tpu_custom_call.1} parent=31 // pred_region
          %183 = dma.done %s176, 2048
        $region36: #{tpu_custom_call.1} parent=31 // pred_fallthru
          _
        %s184 = sand.u32 %s39, 1
        %s185 = scalar_lea.sflag [#allocation3], %s184
        %s186 = sand.u32 %s39, 1
        %s187 = smul.addr %s186, 128
        %s188 = scalar_lea.vmem [#allocation2], %s187
        %p189 = pneg %p52
        %p190 = pneg %p49
        %p191 = pneg %p73
        %p192 = pneg %p70
        %p193 = pneg %p94
        %p194 = pneg %p91
        %p195 = pneg %p120
        %p196 = pneg %p117
        %p197 = scmp.lt.s32.totalorder %s21, 1
        %s198 = scalar_select %p197, %s21, 1
        %s199 = smul.addr %s198, 8
        %s200 = smul.addr %s199, 8
        %s201 = scalar_lea.vmem %s3, %s200
        %s202 = smul.u32 2, %s22
        %p203 = scmp.lt.s32.totalorder %s21, 1
        %s204 = scalar_select %p203, %s21, 1
        %s205 = smul.addr %s204, 8
        %s206 = smul.addr %s205, 8
        %s207 = scalar_lea.vmem %s3, %s206
        %v208 = vld [vmem:[%s179] sm:$0xff]
        %v209 = vld [vmem:[%s179 + $0x8] sm:$0xff]
        %v210 = vld [vmem:[%s179 + $0x10] sm:$0xff]
        %v211 = vld [vmem:[%s179 + $0x18] sm:$0xff]
        %v212 = vld [vmem:[%s179 + $0x20] sm:$0xff]
        %v213 = vld [vmem:[%s179 + $0x28] sm:$0xff]
        %v214 = vld [vmem:[%s179 + $0x30] sm:$0xff]
        %v215 = vld [vmem:[%s179 + $0x38] sm:$0xff]
        %v216 = vld [vmem:[%s179 + $0x40] sm:$0xff]
        %v217 = vld [vmem:[%s179 + $0x48] sm:$0xff]
        %v218 = vld [vmem:[%s179 + $0x50] sm:$0xff]
        %v219 = vld [vmem:[%s179 + $0x58] sm:$0xff]
        %v220 = vld [vmem:[%s179 + $0x60] sm:$0xff]
        %v221 = vld [vmem:[%s179 + $0x68] sm:$0xff]
        %v222 = vld [vmem:[%s179 + $0x70] sm:$0xff]
        %v223 = vld [vmem:[%s179 + $0x78] sm:$0xff]
        %v224 = vadd.f32 %v208, %v209
        %225 = vadd.xlane.f32.xlu0 %v224
        %v226 = vpop.xlane.xlu0 %225
        %v227 = vadd.f32 %v210, %v211
        %228 = vadd.xlane.f32.xlu0 %v227
        %v229 = vpop.xlane.xlu0 %228
        %v230 = vadd.f32 %v212, %v213
        %231 = vadd.xlane.f32.xlu0 %v230
        %v232 = vpop.xlane.xlu0 %231
        %v233 = vadd.f32 %v214, %v215
        %234 = vadd.xlane.f32.xlu0 %v233
        %v235 = vpop.xlane.xlu0 %234
        %v236 = vadd.f32 %v216, %v217
        %237 = vadd.xlane.f32.xlu0 %v236
        %v238 = vpop.xlane.xlu0 %237
        %v239 = vadd.f32 %v218, %v219
        %240 = vadd.xlane.f32.xlu0 %v239
        %v241 = vpop.xlane.xlu0 %240
        %v242 = vadd.f32 %v220, %v221
        %243 = vadd.xlane.f32.xlu0 %v242
        %v244 = vpop.xlane.xlu0 %243
        %v245 = vadd.f32 %v222, %v223
        %246 = vadd.xlane.f32.xlu0 %v245
        %v247 = vpop.xlane.xlu0 %246
        %v248 = vmax.f32 %v208, %v209
        %249 = vmax.xlane.f32.xlu0 %v248
        %v250 = vpop.xlane.xlu0 %249
        %v251 = vmax.f32 %v210, %v211
        %252 = vmax.xlane.f32.xlu0 %v251
        %v253 = vpop.xlane.xlu0 %252
        %v254 = vmax.f32 %v212, %v213
        %255 = vmax.xlane.f32.xlu0 %v254
        %v256 = vpop.xlane.xlu0 %255
        %v257 = vmax.f32 %v214, %v215
        %258 = vmax.xlane.f32.xlu0 %v257
        %v259 = vpop.xlane.xlu0 %258
        %v260 = vmax.f32 %v216, %v217
        %261 = vmax.xlane.f32.xlu0 %v260
        %v262 = vpop.xlane.xlu0 %261
        %v263 = vmax.f32 %v218, %v219
        %264 = vmax.xlane.f32.xlu0 %v263
        %v265 = vpop.xlane.xlu0 %264
        %v266 = vmax.f32 %v220, %v221
        %267 = vmax.xlane.f32.xlu0 %v266
        %v268 = vpop.xlane.xlu0 %267
        %v269 = vmax.f32 %v222, %v223
        %270 = vmax.xlane.f32.xlu0 %v269
        %v271 = vpop.xlane.xlu0 %270
        %v272 = vld [vmem:[%s1] sm:$0xf]
        %v273 = vld [vmem:[%s2] sm:$0xff]
        %v274 = vld [vmem:[%s2 + $0x8] sm:$0xff]
        %v275 = vld [vmem:[%s2 + $0x10] sm:$0xff]
        %v276 = vld [vmem:[%s2 + $0x18] sm:$0xff]
        %v277 = vld [vmem:[%s2 + $0x20] sm:$0xff]
        %v278 = vld [vmem:[%s2 + $0x28] sm:$0xff]
        %v279 = vld [vmem:[%s2 + $0x30] sm:$0xff]
        %v280 = vld [vmem:[%s2 + $0x38] sm:$0xff]
        %v281 = vmul.f32 %v226, 0.00390625
        %v282 = vmul.f32 %v229, 0.00390625
        %v283 = vmul.f32 %v232, 0.00390625
        %v284 = vmul.f32 %v235, 0.00390625
        %v285 = vmul.f32 %v238, 0.00390625
        %v286 = vmul.f32 %v241, 0.00390625
        %v287 = vmul.f32 %v244, 0.00390625
        %v288 = vmul.f32 %v247, 0.00390625
        %v289 = vlaneseq
        %v290 = vand.u32 %v289, 127
        %vm291 = vcmp.eq.s32.totalorder %v290, 0
        %v292 = vsel %vm291, %v281, %v250
        %v293 = vsel %vm291, %v282, %v253
        %v294 = vsel %vm291, %v283, %v256
        %v295 = vsel %vm291, %v284, %v259
        %v296 = vsel %vm291, %v285, %v262
        %v297 = vsel %vm291, %v286, %v265
        %v298 = vsel %vm291, %v287, %v268
        %v299 = vsel %vm291, %v288, %v271
        %vm300 = vcmask 523264
        %v302 = vsel %vm300, %v272, 0
        %304 = vmatprep.subr.mxu0 0.0
        %305 = vmatpush1.msra.mxu0 0.0
        %306 = vmatprep.subr.mxu0 0.0
        %307 = vmatpush1.msra.mxu0 0.0
        %308 = vmatprep.subr.mxu0 0.0
        %309 = vmatpush1.msra.mxu0 0.0
        %310 = vmatprep.subr.mxu0 0.0
        %311 = vmatpush1.msra.mxu0 0.0
        %312 = vmatprep.subr.mxu0 0.0
        %313 = vmatpush1.msra.mxu0 0.0
        %314 = vmatprep.subr.mxu0 0.0
        %315 = vmatpush1.msra.mxu0 0.0
        %316 = vmatprep.subr.mxu0 0.0
        %317 = vmatpush1.msra.mxu0 0.0
        %318 = vmatprep.subr.mxu0 0.0
        %319 = vmatpush1.msra.mxu0 0.0
        %320 = vmatprep.subr.mxu0 0.0
        %321 = vmatpush1.msra.mxu0 %v299
        %322 = vmatprep.subr.mxu0 0.0
        %323 = vmatpush1.msra.mxu0 %v298
        %324 = vmatprep.subr.mxu0 0.0
        %325 = vmatpush1.msra.mxu0 %v297
        %326 = vmatprep.subr.mxu0 0.0
        %327 = vmatpush1.msra.mxu0 %v296
        %328 = vmatprep.subr.mxu0 0.0
        %329 = vmatpush1.msra.mxu0 %v295
        %330 = vmatprep.subr.mxu0 0.0
        %331 = vmatpush1.msra.mxu0 %v294
        %332 = vmatprep.subr.mxu0 0.0
        %333 = vmatpush1.msra.mxu0 %v293
        %334 = vmatprep.subr.mxu0 0.0
        %335 = vmatpush1.msra.mxu0 %v292
        %336 = vmatprep.subr.mxu0 0.0
        %337 = vmatpush2.msra.mxu0 0.0
        %338 = vmatprep.subr.mxu0 0.0
        %339 = vmatpush2.msra.mxu0 0.0
        %340 = vmatprep.subr.mxu0 0.0
        %341 = vmatpush2.msra.mxu0 0.0
        %342 = vmatprep.subr.mxu0 0.0
        %343 = vmatpush2.msra.mxu0 0.0
        %344 = vmatprep.subr.mxu0 0.0
        %345 = vmatpush2.msra.mxu0 0.0
        %346 = vmatprep.subr.mxu0 0.0
        %347 = vmatpush2.msra.mxu0 0.0
        %348 = vmatprep.subr.mxu0 0.0
        %349 = vmatpush2.msra.mxu0 0.0
        %350 = vmatprep.subr.mxu0 0.0
        %351 = vmatpush2.msra.mxu0 0.0
        %352 = vmatprep.subr.mxu0 0.0
        %353 = vmatpush2.msra.mxu0 0.0
        %354 = vmatprep.subr.mxu0 0.0
        %355 = vmatpush2.msra.mxu0 0.0
        %356 = vmatprep.subr.mxu0 0.0
        %357 = vmatpush2.msra.mxu0 0.0
        %358 = vmatprep.subr.mxu0 0.0
        %359 = vmatpush2.msra.mxu0 0.0
        %360 = vmatprep.subr.mxu0 0.0
        %361 = vmatpush2.msra.mxu0 0.0
        %362 = vmatprep.subr.mxu0 0.0
        %363 = vmatpush2.msra.mxu0 0.0
        %364 = vmatprep.subr.mxu0 0.0
        %365 = vmatpush2.msra.mxu0 0.0
        %366 = vmatprep.subr.mxu0 0.0
        %367 = vmatpush2.msra.mxu0 0.0
        %368 = vmatprep.mubr.f32.mxu0 0.0
        %369 = vmatmul.mubr.f32.gmra.mxu0 %v302
        %v370 = vpop.f32.mrf.mxu0
        %v371 = vadd.f32 0.0, %v370
        %v372 = vpop.f32.mrf.mxu0
        %373 = vdwg.mxu0
        %v374 = vmax.f32 %v371, 0.0
        %vm375 = vcmask 31744
        %v377 = vsel %vm375, %v273, 0
        %v380 = vsel %vm375, %v274, 0
        %v383 = vsel %vm375, %v275, 0
        %v386 = vsel %vm375, %v276, 0
        %v389 = vsel %vm375, %v277, 0
        %v392 = vsel %vm375, %v278, 0
        %v395 = vsel %vm375, %v279, 0
        %v398 = vsel %vm375, %v280, 0
        %vm400 = vcmask 1043456
        %v402 = vsel %vm400, %v374, 0
        %404 = vmatprep.subr.mxu0 0.0
        %405 = vmatpush1.msra.mxu0 0.0
        %406 = vmatprep.subr.mxu0 0.0
        %407 = vmatpush1.msra.mxu0 0.0
        %408 = vmatprep.subr.mxu0 0.0
        %409 = vmatpush1.msra.mxu0 0.0
        %410 = vmatprep.subr.mxu0 0.0
        %411 = vmatpush1.msra.mxu0 0.0
        %412 = vmatprep.subr.mxu0 0.0
        %413 = vmatpush1.msra.mxu0 0.0
        %414 = vmatprep.subr.mxu0 0.0
        %415 = vmatpush1.msra.mxu0 0.0
        %416 = vmatprep.subr.mxu0 0.0
        %417 = vmatpush1.msra.mxu0 0.0
        %418 = vmatprep.subr.mxu0 0.0
        %419 = vmatpush1.msra.mxu0 0.0
        %420 = vmatprep.subr.mxu0 0.0
        %421 = vmatpush1.msra.mxu0 0.0
        %422 = vmatprep.subr.mxu0 0.0
        %423 = vmatpush1.msra.mxu0 0.0
        %424 = vmatprep.subr.mxu0 0.0
        %425 = vmatpush1.msra.mxu0 0.0
        %426 = vmatprep.subr.mxu0 0.0
        %427 = vmatpush1.msra.mxu0 0.0
        %428 = vmatprep.subr.mxu0 0.0
        %429 = vmatpush1.msra.mxu0 0.0
        %430 = vmatprep.subr.mxu0 0.0
        %431 = vmatpush1.msra.mxu0 0.0
        %432 = vmatprep.subr.mxu0 0.0
        %433 = vmatpush1.msra.mxu0 0.0
        %434 = vmatprep.subr.mxu0 0.0
        %435 = vmatpush1.msra.mxu0 %v402
        %436 = vmatprep.subr.mxu0 0.0
        %437 = vmatpush2.msra.mxu0 0.0
        %438 = vmatprep.subr.mxu0 0.0
        %439 = vmatpush2.msra.mxu0 0.0
        %440 = vmatprep.subr.mxu0 0.0
        %441 = vmatpush2.msra.mxu0 0.0
        %442 = vmatprep.subr.mxu0 0.0
        %443 = vmatpush2.msra.mxu0 0.0
        %444 = vmatprep.subr.mxu0 0.0
        %445 = vmatpush2.msra.mxu0 0.0
        %446 = vmatprep.subr.mxu0 0.0
        %447 = vmatpush2.msra.mxu0 0.0
        %448 = vmatprep.subr.mxu0 0.0
        %449 = vmatpush2.msra.mxu0 0.0
        %450 = vmatprep.subr.mxu0 0.0
        %451 = vmatpush2.msra.mxu0 0.0
        %452 = vmatprep.subr.mxu0 0.0
        %453 = vmatpush2.msra.mxu0 0.0
        %454 = vmatprep.subr.mxu0 0.0
        %455 = vmatpush2.msra.mxu0 0.0
        %456 = vmatprep.subr.mxu0 0.0
        %457 = vmatpush2.msra.mxu0 0.0
        %458 = vmatprep.subr.mxu0 0.0
        %459 = vmatpush2.msra.mxu0 0.0
        %460 = vmatprep.subr.mxu0 0.0
        %461 = vmatpush2.msra.mxu0 0.0
        %462 = vmatprep.subr.mxu0 0.0
        %463 = vmatpush2.msra.mxu0 0.0
        %464 = vmatprep.subr.mxu0 0.0
        %465 = vmatpush2.msra.mxu0 0.0
        %466 = vmatprep.subr.mxu0 0.0
        %467 = vmatpush2.msra.mxu0 0.0
        %468 = vmatprep.mubr.f32.mxu0 0.0
        %469 = vmatmul.mubr.f32.gmra.mxu0 %v377
        %v470 = vpop.f32.mrf.mxu0
        %v471 = vadd.f32 0.0, %v470
        %v472 = vpop.f32.mrf.mxu0
        %473 = vmatprep.mubr.f32.mxu0 0.0
        %474 = vmatmul.mubr.f32.gmra.mxu0 %v380
        %v475 = vpop.f32.mrf.mxu0
        %v476 = vadd.f32 0.0, %v475
        %v477 = vpop.f32.mrf.mxu0
        %478 = vmatprep.mubr.f32.mxu0 0.0
        %479 = vmatmul.mubr.f32.gmra.mxu0 %v383
        %v480 = vpop.f32.mrf.mxu0
        %v481 = vadd.f32 0.0, %v480
        %v482 = vpop.f32.mrf.mxu0
        %483 = vmatprep.mubr.f32.mxu0 0.0
        %484 = vmatmul.mubr.f32.gmra.mxu0 %v386
        %v485 = vpop.f32.mrf.mxu0
        %v486 = vadd.f32 0.0, %v485
        %v487 = vpop.f32.mrf.mxu0
        %488 = vmatprep.mubr.f32.mxu0 0.0
        %489 = vmatmul.mubr.f32.gmra.mxu0 %v389
        %v490 = vpop.f32.mrf.mxu0
        %v491 = vadd.f32 0.0, %v490
        %v492 = vpop.f32.mrf.mxu0
        %493 = vmatprep.mubr.f32.mxu0 0.0
        %494 = vmatmul.mubr.f32.gmra.mxu0 %v392
        %v495 = vpop.f32.mrf.mxu0
        %v496 = vadd.f32 0.0, %v495
        %v497 = vpop.f32.mrf.mxu0
        %498 = vmatprep.mubr.f32.mxu0 0.0
        %499 = vmatmul.mubr.f32.gmra.mxu0 %v395
        %v500 = vpop.f32.mrf.mxu0
        %v501 = vadd.f32 0.0, %v500
        %v502 = vpop.f32.mrf.mxu0
        %503 = vmatprep.mubr.f32.mxu0 0.0
        %504 = vmatmul.mubr.f32.gmra.mxu0 %v398
        %v505 = vpop.f32.mrf.mxu0
        %v506 = vadd.f32 0.0, %v505
        %v507 = vpop.f32.mrf.mxu0
        %508 = vdwg.mxu0
        %vm509 = vcmask 15360
        %v510 = vsel %vm509, %v471, 0.0
        %511 = vadd.xlane.f32.xlu0 %v510
        %v512 = vpop.xlane.xlu0 %511
        %v513 = vsel %vm509, %v476, 0.0
        %514 = vadd.xlane.f32.xlu0 %v513
        %v515 = vpop.xlane.xlu0 %514
        %v516 = vsel %vm509, %v481, 0.0
        %517 = vadd.xlane.f32.xlu0 %v516
        %v518 = vpop.xlane.xlu0 %517
        %v519 = vsel %vm509, %v486, 0.0
        %520 = vadd.xlane.f32.xlu0 %v519
        %v521 = vpop.xlane.xlu0 %520
        %v522 = vsel %vm509, %v491, 0.0
        %523 = vadd.xlane.f32.xlu0 %v522
        %v524 = vpop.xlane.xlu0 %523
        %v525 = vsel %vm509, %v496, 0.0
        %526 = vadd.xlane.f32.xlu0 %v525
        %v527 = vpop.xlane.xlu0 %526
        %v528 = vsel %vm509, %v501, 0.0
        %529 = vadd.xlane.f32.xlu0 %v528
        %v530 = vpop.xlane.xlu0 %529
        %v531 = vsel %vm509, %v506, 0.0
        %532 = vadd.xlane.f32.xlu0 %v531
        %v533 = vpop.xlane.xlu0 %532
        %v534 = vxor.u32 %v512, 2147483648
        %v535 = vxor.u32 %v515, 2147483648
        %v536 = vxor.u32 %v518, 2147483648
        %v537 = vxor.u32 %v521, 2147483648
        %v538 = vxor.u32 %v524, 2147483648
        %v539 = vxor.u32 %v527, 2147483648
        %v540 = vxor.u32 %v530, 2147483648
        %v541 = vxor.u32 %v533, 2147483648
        %v542 = vmul.f32 %v534, 1.442695
        %v543 = vpow.pop %v542
        %v544 = vmul.f32 %v535, 1.442695
        %v545 = vpow.pop %v544
        %v546 = vmul.f32 %v536, 1.442695
        %v547 = vpow.pop %v546
        %v548 = vmul.f32 %v537, 1.442695
        %v549 = vpow.pop %v548
        %v550 = vmul.f32 %v538, 1.442695
        %v551 = vpow.pop %v550
        %v552 = vmul.f32 %v539, 1.442695
        %v553 = vpow.pop %v552
        %v554 = vmul.f32 %v540, 1.442695
        %v555 = vpow.pop %v554
        %v556 = vmul.f32 %v541, 1.442695
        %v557 = vpow.pop %v556
        %v558 = vadd.f32 %v543, 1.0
        %v559 = vadd.f32 %v545, 1.0
        %v560 = vadd.f32 %v547, 1.0
        %v561 = vadd.f32 %v549, 1.0
        %v562 = vadd.f32 %v551, 1.0
        %v563 = vadd.f32 %v553, 1.0
        %v564 = vadd.f32 %v555, 1.0
        %v565 = vadd.f32 %v557, 1.0
        %v566 = vrcp.pop %v558
        %v567 = vmul.f32 1.0, %v566
        %v568 = vrcp.pop %v559
        %v569 = vmul.f32 1.0, %v568
        %v570 = vrcp.pop %v560
        %v571 = vmul.f32 1.0, %v570
        %v572 = vrcp.pop %v561
        %v573 = vmul.f32 1.0, %v572
        %v574 = vrcp.pop %v562
        %v575 = vmul.f32 1.0, %v574
        %v576 = vrcp.pop %v563
        %v577 = vmul.f32 1.0, %v576
        %v578 = vrcp.pop %v564
        %v579 = vmul.f32 1.0, %v578
        %v580 = vrcp.pop %v565
        %v581 = vmul.f32 1.0, %v580
        %vm582 = vcmask 7168
        %583 = vst.msk [vmem:[%s207] sm:$0xff] %vm582, %v567
        %584 = vst.msk [vmem:[%s207 + $0x8] sm:$0xff] %vm582, %v569
        %585 = vst.msk [vmem:[%s207 + $0x10] sm:$0xff] %vm582, %v571
        %586 = vst.msk [vmem:[%s207 + $0x18] sm:$0xff] %vm582, %v573
        %587 = vst.msk [vmem:[%s207 + $0x20] sm:$0xff] %vm582, %v575
        %588 = vst.msk [vmem:[%s207 + $0x28] sm:$0xff] %vm582, %v577
        %589 = vst.msk [vmem:[%s207 + $0x30] sm:$0xff] %vm582, %v579
        %590 = vst.msk [vmem:[%s207 + $0x38] sm:$0xff] %vm582, %v581
        %p591 = scmp.lt.s32.totalorder %s21, 1
        %s592 = scalar_select %p591, %s21, 1
        %s593 = smul.addr %s592, 8
        %s594 = smul.addr %s593, 8
        %s595 = scalar_lea.vmem %s3, %s594
        // Predicated region
        $region37: #{tpu_custom_call.1} parent=31 // pred_check
          %p596 = pneg %p117
        $region38: #{tpu_custom_call.1} parent=31 // pred_check_branch
          %598 = sbr.rel (%p596) target = $region40
        $region39: #{tpu_custom_call.1} parent=31 // pred_region
          _
        $region40: #{tpu_custom_call.1} parent=31 // pred_fallthru
          _
      $region32: #{tpu_custom_call.1} parent=5 // pred_fallthru
        _
      %p599 = scmp.le.s32.totalorder 2, %s12
      // Predicated region
      $region41: #{tpu_custom_call.1} parent=5 // pred_check
        %p600 = pneg %p599
      $region42: #{tpu_custom_call.1} parent=5 // pred_check_branch
        %602 = sbr.rel (%p600) target = $region44
      $region43: #{tpu_custom_call.1} parent=5 // pred_region
        %s603 = ssub.s32 %s12, 2
        // Predicated region
        $region45: #{tpu_custom_call.1} parent=43 // pred_check
          %p604 = pneg %p123
        $region46: #{tpu_custom_call.1} parent=43 // pred_check_branch
          %606 = sbr.rel (%p604) target = $region48
        $region47: #{tpu_custom_call.1} parent=43 // pred_region
          %p607 = scmp.lt.s32.totalorder %s23, 1
          %s608 = scalar_select %p607, %s23, 1
          %s609 = smul.addr %s608, 8
          %s610 = smul.addr %s609, 8
          %s611 = scalar_lea.vmem %s3, %s610
        $region48: #{tpu_custom_call.1} parent=43 // pred_fallthru
          _
      $region44: #{tpu_custom_call.1} parent=5 // pred_fallthru
        _
    $region6: #{tpu_custom_call.1} parent=1 // loop_footer
      %s16 = sadd.s32 1, %s12
    $region7: #{tpu_custom_call.1} parent=1 // loop_footer_branch
      %11 = sbr.rel target = $region3
    $region8: #{tpu_custom_call.1} parent=1 // loop_exit
      _
    %612 = vsyncpa [#allocation3], 1
    %s613 = scalar_lea.sflag [#allocation3], 1
    %614 = vsyncpa %s613, 1

</llo_original>
